<compile_context>
chip_gen: v7x
topology: tpu7x:2x2x1
jax: 0.10.0
libtpu: 0.0.40
codegen_flags: <defaults>
</compile_context>

<pallas_src>
import jax
import jax.numpy as jnp
from jax.experimental import pallas as pl
from jax.experimental.pallas import tpu as pltpu

_VMEM = pl.BlockSpec(memory_space=pltpu.MemorySpace.VMEM)
_VMEM_BUDGET = 24 * 1024 * 1024        # per-kernel working-set budget (bytes)


def _pick_batch_block(batch, per_row_bytes, *, multiple_of_8=False):
    """Largest batch block (<=128) whose ~double-buffered footprint fits VMEM."""
    cap = max(1, _VMEM_BUDGET // max(1, 2 * per_row_bytes))
    bb = min(batch, cap, 128)
    if multiple_of_8 or bb < batch:
        bb = max(8, (bb // 8) * 8)      # blocked dims must be multiples of 8
    return bb


# ----------------------------------------------------------------------------
# Linear: y = x @ w + b, row-tiled grid, bf16 MXU operands, f32 accumulate.
# Used for the fused forward+backward GRU input projection.
# ----------------------------------------------------------------------------
def _linear_kernel(x_ref, w_ref, b_ref, o_ref):
    x = x_ref[...].astype(w_ref.dtype)
    o_ref[...] = (jnp.dot(x, w_ref[...], preferred_element_type=jnp.float32)
                  + b_ref[...]).astype(o_ref.dtype)


def linear_pallas(x, w, b):
    m, dw = x.shape
    n = w.shape[1]
    bm = m if m <= 512 else 512
    return pl.pallas_call(
        _linear_kernel,
        out_shape=jax.ShapeDtypeStruct((m, n), jnp.float32),
        grid_spec=pltpu.PrefetchScalarGridSpec(
            num_scalar_prefetch=0, grid=(pl.cdiv(m, bm),),
            in_specs=[pl.BlockSpec((bm, dw), lambda i: (i, 0)),
                      pl.BlockSpec((dw, n), lambda i: (0, 0)),
                      pl.BlockSpec((1, n), lambda i: (0, 0))],
            out_specs=pl.BlockSpec((bm, n), lambda i: (i, 0))),
        compiler_params=pltpu.CompilerParams(
            dimension_semantics=("parallel",)),
    )(x, w, b)


# ----------------------------------------------------------------------------
# Fused bidirectional, mask-gated GRU + masked max-pool over time.
#   xp   : (T, B, 6H)  precomputed x@W_ih (+b) for both dirs, gates (r,z,n);
#                      fwd gates in [..., :3H], bwd gates in [..., 3H:]
#   mask : (T, B, 1)   1.0 valid / 0.0 padding
#   outputs: per-direction masked hidden states (T, B, H) in bf16 (conv input)
#            and the pooled feature (B, 2H) = max_t(mask_t * h_t) in f32.
# Backward direction is iterated in reverse inside the kernel (no HBM flips).
# ----------------------------------------------------------------------------
def _bigru_pool_kernel(xp_ref, m_ref, whf_ref, bhf_ref, whb_ref, bhb_ref,
                       df_ref, db_ref, pool_ref):
    T, bb, h6 = xp_ref.shape
    H = h6 // 6
    whf = whf_ref[...]                       # (H, 3H) bf16
    whb = whb_ref[...]
    bhf = bhf_ref[...]                       # (1, 3H) f32
    bhb = bhb_ref[...]

    def gru_cell(x3, hh, h):
        r = jax.nn.sigmoid(x3[:, :H] + hh[:, :H])
        z = jax.nn.sigmoid(x3[:, H:2 * H] + hh[:, H:2 * H])
        n = jnp.tanh(x3[:, 2 * H:] + r * hh[:, 2 * H:])
        return (1.0 - z) * n + z * h

    def step(t, carry):
        hf, hb, mxf, mxb = carry
        tb = T - 1 - t
        xrow_f = xp_ref[t]                   # (bb, 6H)
        xrow_b = xp_ref[tb]
        mf = m_ref[t]                        # (bb, 1)
        mb = m_ref[tb]
        hhf = jnp.dot(hf.astype(whf.dtype), whf,
                      preferred_element_type=jnp.float32) + bhf
        hhb = jnp.dot(hb.astype(whb.dtype), whb,
                      preferred_element_type=jnp.float32) + bhb
        hf_new = gru_cell(xrow_f[:, :3 * H], hhf, hf)
        hb_new = gru_cell(xrow_b[:, 3 * H:], hhb, hb)
        of = mf * hf_new                     # pad_packed: zero padded outputs
        ob = mb * hb_new
        df_ref[t] = of.astype(df_ref.dtype)
        db_ref[tb] = ob.astype(db_ref.dtype)
        hf = of + (1.0 - mf) * hf            # state holds over padding
        hb = ob + (1.0 - mb) * hb
        return hf, hb, jnp.maximum(mxf, of), jnp.maximum(mxb, ob)

    zeros = jnp.zeros((bb, H), jnp.float32)
    ninf = jnp.full((bb, H), -jnp.inf, jnp.float32)
    _, _, mxf, mxb = jax.lax.fori_loop(0, T, step, (zeros, zeros, ninf, ninf),
                                       unroll=2)
    # fused torch.max(gru_init_out * mask, dim=1)[0]
    pool_ref[:, :H] = mxf.astype(pool_ref.dtype)
    pool_ref[:, H:] = mxb.astype(pool_ref.dtype)


def bigru_pool_pallas(xp, mask, whh_f, bhh_f, whh_b, bhh_b):
    T, B, h6 = xp.shape
    H = h6 // 6
    per_row = (T * h6 * xp.dtype.itemsize        # xp
               + T * mask.dtype.itemsize         # mask
               + 2 * T * H * 2                   # bf16 per-direction outputs
               + 2 * H * 4)                      # pooled output
    bb = _pick_batch_block(B, per_row)
    return pl.pallas_call(
        _bigru_pool_kernel,
        out_shape=(jax.ShapeDtypeStruct((T, B, H), jnp.bfloat16),
                   jax.ShapeDtypeStruct((T, B, H), jnp.bfloat16),
                   jax.ShapeDtypeStruct((B, 2 * H), jnp.float32)),
        grid_spec=pltpu.PrefetchScalarGridSpec(
            num_scalar_prefetch=0, grid=(pl.cdiv(B, bb),),
            in_specs=[pl.BlockSpec((T, bb, h6), lambda i: (0, i, 0)),
                      pl.BlockSpec((T, bb, 1), lambda i: (0, i, 0)),
                      pl.BlockSpec(whh_f.shape, lambda i: (0, 0)),
                      pl.BlockSpec(bhh_f.shape, lambda i: (0, 0)),
                      pl.BlockSpec(whh_b.shape, lambda i: (0, 0)),
                      pl.BlockSpec(bhh_b.shape, lambda i: (0, 0))],
            out_specs=(pl.BlockSpec((T, bb, H), lambda i: (0, i, 0)),
                       pl.BlockSpec((T, bb, H), lambda i: (0, i, 0)),
                       pl.BlockSpec((bb, 2 * H), lambda i: (i, 0)))),
        compiler_params=pltpu.CompilerParams(
            dimension_semantics=("parallel",)),
    )(xp, mask, whh_f, bhh_f, whh_b, bhh_b)


# ----------------------------------------------------------------------------
# Fused Conv2d(1,K,(w,2H),padding=(w-1,0)) -> ReLU -> max_pool1d for ALL
# window sizes in one kernel.  Inputs are the per-direction GRU outputs in
# (T, B, H); time padding is assembled in a VMEM scratch; per-tap batched
# matmuls; a per-channel valid-time mask keeps exact per-window semantics
# (relu >= 0, so zeroed tail positions never change the max).
# ----------------------------------------------------------------------------
def _conv_fused_kernel(gf_ref, gb_ref, w_ref, b_ref, vm_ref, o_ref, xpad_ref):
    T, bb, H = gf_ref.shape
    n_taps = w_ref.shape[0]
    ktot = w_ref.shape[3]
    pad = n_taps - 1
    t_out = T + pad

    if pad > 0:                                   # zero padding done in VMEM
        zpad = jnp.zeros((2, pad, bb, H), xpad_ref.dtype)
        xpad_ref[:, :pad] = zpad
        xpad_ref[:, pad + T:] = zpad
    xpad_ref[0, pad:pad + T] = gf_ref[...].astype(xpad_ref.dtype)
    xpad_ref[1, pad:pad + T] = gb_ref[...].astype(xpad_ref.dtype)

    w = w_ref[...]                                # (n_taps, 2, H, Ktot) bf16
    acc = jnp.zeros((t_out * bb, ktot), jnp.float32)
    for j in range(n_taps):                       # static tap loop (small)
        xf = xpad_ref[0, j:j + t_out].reshape(t_out * bb, H)
        xb = xpad_ref[1, j:j + t_out].reshape(t_out * bb, H)
        acc = acc + jnp.dot(xf, w[j, 0], preferred_element_type=jnp.float32)
        acc = acc + jnp.dot(xb, w[j, 1], preferred_element_type=jnp.float32)
    acc = jnp.maximum(acc + b_ref[...], 0.0)
    acc = acc.reshape(t_out, bb, ktot) * vm_ref[...][:, None, :]
    o_ref[...] = jnp.max(acc, axis=0).astype(o_ref.dtype)


def conv_fused_pallas(g_f, g_b, params):
    T, B, H = g_f.shape
    windows = params['kernel_sizes']
    K = params['conv_w_%d' % windows[0]].shape[2]
    n_win = len(windows)
    ktot = K * n_win
    maxw = max(windows)
    pad = maxw - 1
    t_out = T + pad

    # pack every window into one weight (right-aligned taps, zeros elsewhere)
    w_packed = jnp.zeros((maxw, 2, H, ktot), jnp.float32)
    b_parts, bounds = [], []
    for idx, ws in enumerate(windows):
        wcv = params['conv_w_%d' % ws].reshape(ws, 2, H, K)
        w_packed = w_packed.at[maxw - ws:, :, :, idx * K:(idx + 1) * K].set(wcv)
        b_parts.append(params['conv_b_%d' % ws])
        bounds.append(jnp.full((K,), T + ws - 1, jnp.int32))
    w_packed = w_packed.astype(jnp.bfloat16)
    b_packed = jnp.concatenate(b_parts, axis=1)
    vmask = (jnp.arange(t_out)[:, None]
             < jnp.concatenate(bounds)[None, :]).astype(jnp.float32)

    per_row = (2 * T * H * 2                       # bf16 inputs
               + 2 * (T + 2 * pad) * H * 2         # padded VMEM scratch
               + t_out * ktot * 4                  # accumulator
               + ktot * 4)
    bb = _pick_batch_block(B, per_row, multiple_of_8=True)
    return pl.pallas_call(
        _conv_fused_kernel,
        out_shape=jax.ShapeDtypeStruct((B, ktot), jnp.float32),
        grid_spec=pltpu.PrefetchScalarGridSpec(
            num_scalar_prefetch=0, grid=(pl.cdiv(B, bb),),
            in_specs=[pl.BlockSpec((T, bb, H), lambda i: (0, i, 0)),
                      pl.BlockSpec((T, bb, H), lambda i: (0, i, 0)),
                      pl.BlockSpec((maxw, 2, H, ktot),
                                   lambda i: (0, 0, 0, 0)),
                      pl.BlockSpec((1, ktot), lambda i: (0, 0)),
                      pl.BlockSpec((t_out, ktot), lambda i: (0, 0))],
            out_specs=pl.BlockSpec((bb, ktot), lambda i: (i, 0)),
            scratch_shapes=[pltpu.VMEM((2, T + 2 * pad, bb, H),
                                       jnp.bfloat16)]),
        compiler_params=pltpu.CompilerParams(
            dimension_semantics=("parallel",)),
    )(g_f, g_b, w_packed, b_packed, vmask)


# ----------------------------------------------------------------------------
# Support attention gating: w = softmax_S((s_feature @ Wk + bk)·(f @ Wq + bq)),
# out = f + sum_s w_s * s_feature_s.  Batched over B; static loop over the
# (small) number of support captions S; EUP reciprocal for the softmax denom.
# ----------------------------------------------------------------------------
def _support_attention_kernel(sf_ref, f_ref, wk_ref, bk_ref, wq_ref, bq_ref,
                              o_ref):
    _, S, _ = sf_ref.shape
    f = f_ref[...]
    wk = wk_ref[...]
    bk = bk_ref[...]
    q = jnp.dot(f.astype(wq_ref.dtype), wq_ref[...],
                preferred_element_type=jnp.float32) + bq_ref[...]     # (B, Hh)

    sf_s, scores = [], []
    for s in range(S):                       # static: S = #support captions
        sf_cur = sf_ref[:, s, :]             # (B, D)
        k_s = jnp.dot(sf_cur.astype(wk.dtype), wk,
                      preferred_element_type=jnp.float32) + bk        # (B, Hh)
        sf_s.append(sf_cur)
        scores.append(jnp.sum(k_s * q, axis=1, keepdims=True))        # (B, 1)

    m = scores[0]
    for s in range(1, S):
        m = jnp.maximum(m, scores[s])
    exps = [jnp.exp(sc - m) for sc in scores]
    denom = exps[0]
    for s in range(1, S):
        denom = denom + exps[s]
    inv = pl.reciprocal(denom, approx=True)                           # (B, 1)

    gated = jnp.zeros_like(f)
    for s in range(S):
        gated = gated + (exps[s] * inv) * sf_s[s]
    o_ref[...] = (f + gated).astype(o_ref.dtype)


def support_attention_pallas(sf, f, wk, bk, wq, bq):
    return pl.pallas_call(
        _support_attention_kernel,
        out_shape=jax.ShapeDtypeStruct(f.shape, jnp.float32),
        in_specs=[_VMEM] * 6,
        out_specs=_VMEM,
    )(sf, f, wk.astype(jnp.bfloat16), bk, wq.astype(jnp.bfloat16), bq)


# ----------------------------------------------------------------------------
# encode_text / forward (glue in plain JAX, hot paths in Pallas)
# ----------------------------------------------------------------------------
def encode_text_pallas(params, cap_wids, cap_bows, cap_mask):
    B, T = cap_wids.shape
    H = params['w_hh_f'].shape[0]
    dw = params['embed'].shape[1]

    emb = params['embed'][cap_wids.T]                       # (T, B, Dw)

    # fused fwd+bwd input projection: one (T*B, Dw) @ (Dw, 6H) matmul
    w_ih = jnp.concatenate([params['w_ih_f'], params['w_ih_b']],
                           axis=1).astype(jnp.bfloat16)
    b_ih = jnp.concatenate([params['b_ih_f'], params['b_ih_b']], axis=1)
    xp = linear_pallas(emb.reshape(T * B, dw), w_ih, b_ih).reshape(T, B, 6 * H)

    mask_tb1 = cap_mask.T[:, :, None].astype(jnp.float32)   # (T, B, 1)

    dirs_f, dirs_b, gru_out = bigru_pool_pallas(
        xp, mask_tb1,
        params['w_hh_f'].astype(jnp.bfloat16), params['b_hh_f'],
        params['w_hh_b'].astype(jnp.bfloat16), params['b_hh_b'])

    con_out = conv_fused_pallas(dirs_f, dirs_b, params)     # (B, K*n_win)

    # dropout: eval-mode identity; concate == 'full'
    return jnp.concatenate([gru_out, con_out, cap_bows], axis=1)


# -------------------------- pure-JAX f32 reference ---------------------------
def _gru_scan_ref(xp, mask, whh, bhh):
    H = whh.shape[0]

    def step(h, inp):
        x, m = inp
        hh = h @ whh + bhh
        r = jax.nn.sigmoid(x[:, :H] + hh[:, :H])
        z = jax.nn.sigmoid(x[:, H:2 * H] + hh[:, H:2 * H])
        n = jnp.tanh(x[:, 2 * H:] + r * hh[:, 2 * H:])
        h_new = (1.0 - z) * n + z * h
        return m * h_new + (1.0 - m) * h, m * h_new

    h0 = jnp.zeros((xp.shape[1], H), xp.dtype)
    _, outs = jax.lax.scan(step, h0, (xp, mask))
    return outs


def encode_text_ref(params, cap_wids, cap_bows, cap_mask):
    emb = params['embed'][cap_wids]                         # (B, T, Dw)
    B, T, dw = emb.shape
    H = params['w_hh_f'].shape[0]
    emb2d = emb.reshape(B * T, dw)
    xp_f = (emb2d @ params['w_ih_f'] + params['b_ih_f']).reshape(B, T, 3 * H)
    xp_b = (emb2d @ params['w_ih_b'] + params['b_ih_b']).reshape(B, T, 3 * H)

    mask_tb1 = cap_mask.T[:, :, None]
    h_f = _gru_scan_ref(xp_f.transpose(1, 0, 2), mask_tb1,
                        params['w_hh_f'], params['b_hh_f']).transpose(1, 0, 2)
    xp_b_rev = jnp.flip(xp_b, axis=1).transpose(1, 0, 2)
    mask_rev = jnp.flip(cap_mask, axis=1).T[:, :, None]
    h_b = _gru_scan_ref(xp_b_rev, mask_rev, params['w_hh_b'], params['b_hh_b'])
    h_b = jnp.flip(h_b.transpose(1, 0, 2), axis=1)
    gru_init = jnp.concatenate([h_f, h_b], axis=-1)         # (B, T, 2H)

    gru_out = jnp.max(gru_init * cap_mask[:, :, None], axis=1)
    cons = []
    for ws in params['kernel_sizes']:
        w = params['conv_w_%d' % ws]
        b = params['conv_b_%d' % ws]
        pad = ws - 1
        gp = jnp.pad(gru_init, ((0, 0), (pad, pad), (0, 0)))
        t_out = T + ws - 1
        acc = jnp.zeros((B, t_out, w.shape[2]), jnp.float32)
        for j in range(ws):
            acc = acc + jnp.einsum('btc,ck->btk', gp[:, j:j + t_out, :], w[j])
        acc = jnp.maximum(acc + b, 0.0)
        cons.append(jnp.max(acc, axis=1))
    con_out = jnp.concatenate(cons, axis=1)
    return jnp.concatenate([gru_out, con_out, cap_bows], axis=1)


def support_attention_ref(sf, f, wk, bk, wq, bq):
    q = f @ wq + bq
    k = jnp.einsum('bsd,dh->bsh', sf, wk) + bk
    w = jax.nn.softmax(jnp.einsum('bsh,bh->bs', k, q), axis=1)
    return f + jnp.sum(w[:, :, None] * sf, axis=1)


def forward(params, text, support_text, use_pallas=True):
    enc = encode_text_pallas if use_pallas else encode_text_ref
    cap_wids, cap_bows, lengths, cap_mask = text            # lengths ⊂ cap_mask
    feature = enc(params, cap_wids, cap_bows, cap_mask)
    if support_text is None:
        return feature
    s_wids, s_bows, s_lens, s_mask = support_text
    B, S, T = s_wids.shape
    # all S support captions encoded in ONE batched pass
    s_feature = enc(params, s_wids.reshape(B * S, T),
                    s_bows.reshape(B * S, -1),
                    s_mask.reshape(B * S, T)).reshape(B, S, -1)
    attn = support_attention_pallas if use_pallas else support_attention_ref
    return attn(s_feature, feature, params['wk'], params['bk'],
                params['wq'], params['bq'])


# ----------------------------------------------------------------------------
# Deterministic parameter construction (shapes follow the nn.Module __init__)
# ----------------------------------------------------------------------------
def init_params(key, vocab_size, word_dim, rnn_size, kernel_num, kernel_sizes,
                feature_dim, hidden_size):
    ks = jax.random.split(key, 16)
    u = lambda k, shape, s=0.1: jax.random.uniform(k, shape, jnp.float32, -s, s)
    params = {
        'embed': u(ks[0], (vocab_size, word_dim)),
        # GRU weights stored pre-transposed: x @ w_ih -> (.., 3H), h @ w_hh
        'w_ih_f': u(ks[1], (word_dim, 3 * rnn_size)),
        'b_ih_f': u(ks[2], (1, 3 * rnn_size)),
        'w_hh_f': u(ks[3], (rnn_size, 3 * rnn_size)),
        'b_hh_f': u(ks[4], (1, 3 * rnn_size)),
        'w_ih_b': u(ks[5], (word_dim, 3 * rnn_size)),
        'b_ih_b': u(ks[6], (1, 3 * rnn_size)),
        'w_hh_b': u(ks[7], (rnn_size, 3 * rnn_size)),
        'b_hh_b': u(ks[8], (1, 3 * rnn_size)),
        'wk': u(ks[9], (feature_dim, hidden_size)),
        'bk': u(ks[10], (1, hidden_size)),
        'wq': u(ks[11], (feature_dim, hidden_size)),
        'bq': u(ks[12], (1, hidden_size)),
        'kernel_sizes': tuple(kernel_sizes),
    }
    ck = jax.random.split(ks[13], len(kernel_sizes))
    for i, ws in enumerate(kernel_sizes):
        k1, k2 = jax.random.split(ck[i])
        params['conv_w_%d' % ws] = u(k1, (ws, 2 * rnn_size, kernel_num))
        params['conv_b_%d' % ws] = u(k2, (1, kernel_num))
    return params


if __name__ == "__main__":
    vocab_size, word_dim, rnn_size = 32, 16, 16
    kernel_num, kernel_sizes, hidden_size = 8, (2, 3), 16
    B, T, S = 2, 8, 3
    feature_dim = 2 * rnn_size + kernel_num * len(kernel_sizes) + vocab_size

    key = jax.random.PRNGKey(0)
    pkey, dkey = jax.random.split(key)
    params = init_params(pkey, vocab_size, word_dim, rnn_size, kernel_num,
                         kernel_sizes, feature_dim, hidden_size)

    d = jax.random.split(dkey, 8)

    def make_text(kw, kb, kl, B_, T_):
        wids = jax.random.randint(kw, (B_, T_), 0, vocab_size)
        bows = jax.random.uniform(kb, (B_, vocab_size), jnp.float32)
        lengths = jax.random.randint(kl, (B_,), 2, T_ + 1)
        mask = (jnp.arange(T_)[None, :] < lengths[:, None]).astype(jnp.float32)
        return wids, bows, lengths, mask

    cap_wids, cap_bows, lengths, cap_mask = make_text(d[0], d[1], d[2], B, T)
    text = (cap_wids, cap_bows, lengths, cap_mask)

    s_w, s_b, s_l, s_m = [], [], [], []
    sk = jax.random.split(d[3], S)
    for i in range(S):
        a, b_, c = jax.random.split(sk[i], 3)
        w_, bo_, l_, m_ = make_text(a, b_, c, B, T)
        s_w.append(w_); s_b.append(bo_); s_l.append(l_); s_m.append(m_)
    support_text = (jnp.stack(s_w, 1), jnp.stack(s_b, 1),
                    jnp.stack(s_l, 1), jnp.stack(s_m, 1))

    out = forward(params, text, support_text, use_pallas=True)
    out = jax.block_until_ready(out)

    ref = forward(params, text, support_text, use_pallas=False)
    assert out.shape == (B, feature_dim)
    assert bool(jnp.all(jnp.isfinite(out)))
    # bf16 MXU operands / approx reciprocal vs. an all-f32 reference
    assert bool(jnp.allclose(out, ref, atol=2e-2, rtol=2e-2)), \
        float(jnp.max(jnp.abs(out - ref)))
    print("KERNEL_OK")
</pallas_src>

<mosaic_0001>
module attributes {stable_mosaic.version = 11 : i64} {
  func.func @_linear_kernel(%arg0: i32, %arg1: memref<16x16xf32, #tpu.memory_space<vmem>>, %arg2: memref<16x96xbf16, #tpu.memory_space<vmem>>, %arg3: memref<1x96xf32, #tpu.memory_space<vmem>>, %arg4: memref<16x96xf32, #tpu.memory_space<vmem>>) attributes {dimension_semantics = [#tpu.dimension_semantics<parallel>], iteration_bounds = array<i64: 1>, scalar_prefetch = 0 : i64, scratch_operands = 0 : i64, tpu.core_type = #tpu.core_type<tc>, window_params = [{transform_indices = @transform_0, window_bounds = array<i64: 16, 16>}, {pipeline_mode = #tpu.pipeline_mode<synchronous>, transform_indices = @transform_1, window_bounds = array<i64: 16, 96>}, {pipeline_mode = #tpu.pipeline_mode<synchronous>, transform_indices = @transform_2, window_bounds = array<i64: 1, 96>}, {transform_indices = @transform_3, window_bounds = array<i64: 16, 96>}]} {
    %c0 = arith.constant 0 : index
    %c0_0 = arith.constant 0 : index
    %0 = vector.load %arg1[%c0, %c0_0] : memref<16x16xf32, #tpu.memory_space<vmem>>, vector<16x16xf32>
    %1 = arith.truncf %0 : vector<16x16xf32> to vector<16x16xbf16>
    %c0_1 = arith.constant 0 : index
    %c0_2 = arith.constant 0 : index
    %2 = vector.load %arg2[%c0_1, %c0_2] : memref<16x96xbf16, #tpu.memory_space<vmem>>, vector<16x96xbf16>
    %cst = arith.constant dense<0.000000e+00> : vector<16x96xf32>
    %3 = tpu.matmul %1, %2, %cst {dimension_numbers = #tpu.dot_dimension_numbers<[1], [0], [0], [1], [0, 0, 1, 1], [], []>} : vector<16x16xbf16>, vector<16x96xbf16>, vector<16x96xf32> -> vector<16x96xf32>
    %c0_3 = arith.constant 0 : index
    %c0_4 = arith.constant 0 : index
    %4 = vector.load %arg3[%c0_3, %c0_4] : memref<1x96xf32, #tpu.memory_space<vmem>>, vector<1x96xf32>
    %5 = vector.broadcast %4 : vector<1x96xf32> to vector<16x96xf32>
    %6 = arith.addf %3, %5 : vector<16x96xf32>
    %c0_5 = arith.constant 0 : index
    %c0_6 = arith.constant 0 : index
    %7 = vector.load %arg4[%c0_5, %c0_6] : memref<16x96xf32, #tpu.memory_space<vmem>>, vector<16x96xf32>
    tpu.vector_store %arg4[%c0_5, %c0_6], %6 {strides = array<i32>} : memref<16x96xf32, #tpu.memory_space<vmem>>, vector<16x96xf32>,
    return
  }
  func.func @transform_0(%arg0: i32) -> (i32, i32) {
    %c0_i32 = arith.constant 0 : i32
    %c0_i32_0 = arith.constant 0 : i32
    return %arg0, %c0_i32 : i32, i32
  }
  func.func @transform_1(%arg0: i32) -> (i32, i32) {
    %c0_i32 = arith.constant 0 : i32
    %c0_i32_0 = arith.constant 0 : i32
    %c0_i32_1 = arith.constant 0 : i32
    return %c0_i32, %c0_i32_0 : i32, i32
  }
  func.func @transform_2(%arg0: i32) -> (i32, i32) {
    %c0_i32 = arith.constant 0 : i32
    %c0_i32_0 = arith.constant 0 : i32
    %c0_i32_1 = arith.constant 0 : i32
    return %c0_i32, %c0_i32_0 : i32, i32
  }
  func.func @transform_3(%arg0: i32) -> (i32, i32) {
    %c0_i32 = arith.constant 0 : i32
    %c0_i32_0 = arith.constant 0 : i32
    return %arg0, %c0_i32 : i32, i32
  }
}

</mosaic_0001>

<llo_original>
// kernel: tpu_custom_call.1
$region0: #{tpu_custom_call.1}
  #allocation0 [shape = 'u32[]', space=smem, size = 0x4, offset = 0x4, fixed_abs, tag = 'smem constant byte address 0x4 - core index']
  #allocation1 [shape = 'u32[144,128]{1,0:T(1,128)}', space=vmem, size = 0x12000, scoped, tag = 'internal scratch']
  %s0 = inlined_call_operand.hbm [shape: f32[16,16], index: 0, kind: input, shape index: {}]
  %s1 = inlined_call_operand.hbm [shape: bf16[16,96], index: 1, kind: input, shape index: {}]
  %s2 = inlined_call_operand.vmem [shape: f32[1,96], index: 2, kind: input, shape index: {}]
  %s3 = inlined_call_operand.hbm [shape: f32[16,96], index: 3, kind: output, shape index: {}]
  %s4 = sld [smem:[#allocation0]]
  $region30: #{tpu_custom_call.1} parent=0
    _
  %s6 = ssub.s32 1, %s4
  %s7 = scalar_select 0, %s6, %s4
  $region1: #{tpu_custom_call.1} parent=0
    #allocation2 [shape = 'u8[8192]{0}', space=vmem, size = 0x2000, scoped, tag = 'input window, operand 0, single buffered']
    #allocation3 [shape = 's32[1]{0}', space=sflag, size = 0x4, scoped, tag = 'scoped memory for tpu_custom_call.1']
    #allocation4 [shape = 's32[1]{0}', space=sflag, size = 0x4, scoped, tag = 'scoped memory for tpu_custom_call.1']
    #allocation5 [shape = 'u8[4096]{0}', space=vmem, size = 0x1000, scoped, tag = 'input window, operand 1, single buffered']
    #allocation6 [shape = 's32[1]{0}', space=sflag, size = 0x4, scoped, tag = 'scoped memory for tpu_custom_call.1']
    #allocation7 [shape = 'u8[8192]{0}', space=vmem, size = 0x2000, scoped, tag = 'output window, operand 0, single buffered']
    %8 = vsyncpa [#allocation3], 0
    %9 = vsyncpa [#allocation6], 0
    %10 = vsyncpa [#allocation4], 0
    // Predicated region
    $region2: #{tpu_custom_call.1} parent=1 // pred_check
      _
    $region3: #{tpu_custom_call.1} parent=1 // pred_check_branch
      %12 = sbr.rel (0) target = $region5
    $region4: #{tpu_custom_call.1} parent=1 // pred_region
      %s14 = ssub.s32 256, 256
      %15 = vsyncadd [#allocation3], %s14
      %s16 = sshll.u32 [#allocation2], 4
      %s17 = int_to_ptr.vmem [resolvable:$true] %s16
      %22 = dma.hbm_to_vmem [thread:$0]  %s0, 256, %s17, [#allocation3], 128, 128, 8
    $region5: #{tpu_custom_call.1} parent=1 // pred_fallthru
      _
    // Predicated region
    $region6: #{tpu_custom_call.1} parent=1 // pred_check
      _
    $region7: #{tpu_custom_call.1} parent=1 // pred_check_branch
      %24 = sbr.rel (0) target = $region9
    $region8: #{tpu_custom_call.1} parent=1 // pred_region
      %s26 = ssub.s32 128, 128
      %27 = vsyncadd [#allocation6], %s26
      %s28 = sshll.u32 [#allocation5], 4
      %s29 = int_to_ptr.vmem [resolvable:$true] %s28
      %34 = dma.hbm_to_vmem [thread:$0]  %s1, 128, %s29, [#allocation6], 64, 64, 4
    $region9: #{tpu_custom_call.1} parent=1 // pred_fallthru
      _
    // Predicated region
    $region10: #{tpu_custom_call.1} parent=1 // pred_check
      _
    $region11: #{tpu_custom_call.1} parent=1 // pred_check_branch
      %36 = sbr.rel (0) target = $region13
    $region12: #{tpu_custom_call.1} parent=1 // pred_region
      _
    $region13: #{tpu_custom_call.1} parent=1 // pred_fallthru
      _
    // Predicated region
    $region14: #{tpu_custom_call.1} parent=1 // pred_check
      _
    $region15: #{tpu_custom_call.1} parent=1 // pred_check_branch
      %38 = sbr.rel (0) target = $region17
    $region16: #{tpu_custom_call.1} parent=1 // pred_region
      %39 = dma.done [#allocation3], 256
    $region17: #{tpu_custom_call.1} parent=1 // pred_fallthru
      _
    // Predicated region
    $region18: #{tpu_custom_call.1} parent=1 // pred_check
      _
    $region19: #{tpu_custom_call.1} parent=1 // pred_check_branch
      %41 = sbr.rel (0) target = $region21
    $region20: #{tpu_custom_call.1} parent=1 // pred_region
      %42 = dma.done [#allocation6], 128
    $region21: #{tpu_custom_call.1} parent=1 // pred_fallthru
      _
    %v44 = vld [vmem:[#allocation2] sm:$0xff]
    %v45 = vld [vmem:[#allocation2 + $0x8] sm:$0xff]
    %v46 = vpack.c.bf16 %v45, %v44
    %v47 = vld [vmem:[#allocation5] sm:$0xf]
    %v48 = vld [vmem:[#allocation5 + $0x4] sm:$0xf]
    %v49 = vld [vmem:[%s2] sm:$0x1]
    %v51 = vlaneseq
    %v52 = vshrl.u32 %v51, 7
    %v53 = vsub.s32 0, %v52
    %v54 = vrot.slane %v49, %v53
    %v58 = vunpack.c.l.b16 %v47
    %v59 = vunpack.c.l.b16 %v48
    %v60 = vpack.c.b16 %v59, %v58
    %vm62 = vcmask 130048
    %v64 = vsel %vm62, %v46, 0
    %66 = vmatprep.subr.bf16.mxu0 0
    %67 = vmatpush1.bf16.msra.mxu0 %v60
    %68 = vmatprep.subr.bf16.mxu0 0
    %69 = vmatpush1.bf16.msra.mxu0 0
    %70 = vmatprep.subr.bf16.mxu0 0
    %71 = vmatpush1.bf16.msra.mxu0 0
    %72 = vmatprep.subr.bf16.mxu0 0
    %73 = vmatpush1.bf16.msra.mxu0 0
    %74 = vmatprep.subr.bf16.mxu0 0
    %75 = vmatpush1.bf16.msra.mxu0 0
    %76 = vmatprep.subr.bf16.mxu0 0
    %77 = vmatpush1.bf16.msra.mxu0 0
    %78 = vmatprep.subr.bf16.mxu0 0
    %79 = vmatpush1.bf16.msra.mxu0 0
    %80 = vmatprep.subr.bf16.mxu0 0
    %81 = vmatpush1.bf16.msra.mxu0 0
    %82 = vmatprep.subr.bf16.mxu0 0
    %83 = vmatpush1.bf16.msra.mxu0 0
    %84 = vmatprep.subr.bf16.mxu0 0
    %85 = vmatpush1.bf16.msra.mxu0 0
    %86 = vmatprep.subr.bf16.mxu0 0
    %87 = vmatpush1.bf16.msra.mxu0 0
    %88 = vmatprep.subr.bf16.mxu0 0
    %89 = vmatpush1.bf16.msra.mxu0 0
    %90 = vmatprep.subr.bf16.mxu0 0
    %91 = vmatpush1.bf16.msra.mxu0 0
    %92 = vmatprep.subr.bf16.mxu0 0
    %93 = vmatpush1.bf16.msra.mxu0 0
    %94 = vmatprep.subr.bf16.mxu0 0
    %95 = vmatpush1.bf16.msra.mxu0 0
    %96 = vmatprep.subr.bf16.mxu0 0
    %97 = vmatpush1.bf16.msra.mxu0 0
    %98 = vmatprep.mubr.bf16.mxu0 0
    %99 = vmatmul.mubr.bf16.gmra.mrb[0].mxu0 %v64
    %v100 = vpop.f32.mrb[0].mxu0
    %v101 = vadd.f32 %v54, %v100
    %v102 = vpop.f32.mrb[0].mxu0
    %v103 = vpop.f32.mrb[0].mxu0
    %v104 = vadd.f32 %v54, %v103
    %v105 = vpop.f32.mrb[0].mxu0
    %106 = vdwg.mxu0
    %vm107 = vcmask 785408
    %108 = vst.msk [vmem:[#allocation7] sm:$0xff] %vm107, %v101
    %109 = vst.msk [vmem:[#allocation7 + $0x8] sm:$0xff] %vm107, %v104
    // Predicated region
    $region22: #{tpu_custom_call.1} parent=1 // pred_check
      _
    $region23: #{tpu_custom_call.1} parent=1 // pred_check_branch
      %111 = sbr.rel (0) target = $region25
    $region24: #{tpu_custom_call.1} parent=1 // pred_region
      %s113 = ssub.s32 256, 256
      %114 = vsyncadd [#allocation4], %s113
      %s115 = sshll.u32 [#allocation7], 4
      %s116 = int_to_ptr.vmem [resolvable:$true] %s115
      %121 = dma.vmem_to_hbm [thread:$0]  %s116, 256, %s3, [#allocation4], 128, 128, 8
    $region25: #{tpu_custom_call.1} parent=1 // pred_fallthru
      _
    // Predicated region
    $region26: #{tpu_custom_call.1} parent=1 // pred_check
      _
    $region27: #{tpu_custom_call.1} parent=1 // pred_check_branch
      %123 = sbr.rel (0) target = $region29
    $region28: #{tpu_custom_call.1} parent=1 // pred_region
      %124 = dma.done [#allocation4], 256
    $region29: #{tpu_custom_call.1} parent=1 // pred_fallthru
      _
    %125 = vsyncpa [#allocation3], 1
    %126 = vsyncpa [#allocation6], 1
    %127 = vsyncpa [#allocation4], 1

</llo_original>
